<compile_context>
chip_gen: v7x
topology: tpu7x:2x2x1
jax: 0.10.0
libtpu: 0.0.40
codegen_flags: <defaults>
</compile_context>

<pallas_src>
import functools

import jax
import jax.numpy as jnp
from jax.experimental import pallas as pl
from jax.experimental.pallas import tpu as pltpu


def _round_up(v, m):
    return ((v + m - 1) // m) * m


def _make_mlp_kernel(num_layers, compute_dtype):
    """Fused-MLP kernel body: h = x; per layer h = h @ W + b; ReLU between layers."""

    def kernel(x_ref, *refs):
        # refs = (w0, b0, w1, b1, ..., out)
        o_ref = refs[-1]
        params = refs[:-1]
        h = x_ref[...].astype(compute_dtype)       # (tb, d_in) -> bf16 in-register
        for i in range(num_layers):
            w = params[2 * i][...]                 # (d_in, d_out) compute_dtype
            b = params[2 * i + 1][...]             # (1, d_out)    float32
            acc = jnp.dot(h, w, preferred_element_type=jnp.float32) + b
            if i < num_layers - 1:
                # ReLU; dropout is identity at inference.
                h = jnp.maximum(acc, 0.0).astype(compute_dtype)
            else:
                h = acc
        o_ref[...] = h.astype(o_ref.dtype)

    return kernel


def init_occupation_encoder_params(input_dim, hidden_dim, output_dim, num_layers=2,
                                   key=jax.random.PRNGKey(0), dtype=jnp.float32):
    """Deterministic init; same layer shapes as the PyTorch module (W stored as (in, out))."""
    dims = [(input_dim, hidden_dim)]
    for _ in range(num_layers - 2):
        dims.append((hidden_dim, hidden_dim))
    if num_layers > 1:
        dims.append((hidden_dim, output_dim))

    params = []
    for (din, dout) in dims:
        kw, kb, key = jax.random.split(key, 3)
        bound = 1.0 / float(din) ** 0.5
        w = jax.random.uniform(kw, (din, dout), dtype, -bound, bound)
        b = jax.random.uniform(kb, (1, dout), dtype, -bound, bound)
        params.append((w, b))
    return params


def prepare_occupation_encoder_params(params, compute_dtype=jnp.bfloat16):
    """One-time parameter prep (call once, outside the jitted forward).

    * Layer 0 keeps its true input dim (x is not feature-padded in HBM).
    * Every layer's output dim is zero-padded to a multiple of 128 (lane-dense blocks);
      subsequent layers' input dims are zero-padded to match, so padded columns stay
      exactly 0 through the whole network.
    * Weights cast to bf16 (f32 accumulation in-kernel); biases kept f32.
    """
    prepared = []
    prev_out_p = None
    for i, (w, b) in enumerate(params):
        din, dout = w.shape
        din_p = din if i == 0 else prev_out_p
        dout_p = _round_up(dout, 128)
        w_p = jnp.pad(w, ((0, din_p - din), (0, dout_p - dout))).astype(compute_dtype)
        b_p = jnp.pad(b, ((0, 0), (0, dout_p - dout))).astype(jnp.float32)
        prepared.append((w_p, b_p))
        prev_out_p = dout_p
    return tuple(prepared)


@functools.partial(jax.jit, static_argnames=("out_dim", "batch_tile", "output_dtype"))
def occupation_encoder_forward(x, prepared_params, out_dim, batch_tile=512,
                               output_dtype=None):
    """Fused MLP forward: x (B, input_dim) -> (B, out_dim).

    `prepared_params` must come from prepare_occupation_encoder_params (padded bf16).
    `output_dtype` lets callers request a bf16 output (halves the dominant HBM write);
    default keeps x.dtype.
    """
    B, in_dim = x.shape
    num_layers = len(prepared_params)
    assert prepared_params[0][0].shape[0] == in_dim, "params not prepared for this input dim"
    out_p = prepared_params[-1][0].shape[1]
    compute_dtype = prepared_params[-1][0].dtype
    out_dtype = x.dtype if output_dtype is None else output_dtype

    # ---- Batch tiling (sublane axis): 16-row multiples (bf16 packing), no forced split. ----
    B16 = _round_up(B, 16)
    batch_tile = _round_up(max(16, batch_tile), 16)
    n_steps = max(1, -(-B16 // batch_tile))
    tb = _round_up(-(-B16 // n_steps), 16)
    B_pad = _round_up(B16, tb)
    grid = (B_pad // tb,)

    if B_pad != B:
        x = jnp.pad(x, ((0, B_pad - B), (0, 0)))

    # ---- BlockSpecs: x / out tiled along batch; weights/biases whole, constant index. ----
    in_specs = [pl.BlockSpec((tb, in_dim), lambda i: (i, 0))]
    flat_args = []
    for (w_p, b_p) in prepared_params:
        in_specs.append(pl.BlockSpec(w_p.shape, lambda i: (0, 0)))
        in_specs.append(pl.BlockSpec(b_p.shape, lambda i: (0, 0)))
        flat_args.extend([w_p, b_p])
    out_spec = pl.BlockSpec((tb, out_p), lambda i: (i, 0))

    # ---- Generation-aware VMEM budget (no double-counted double buffering). ----
    xbytes = jnp.dtype(x.dtype).itemsize
    obytes = jnp.dtype(out_dtype).itemsize
    weight_bytes = 2 * sum(w.size * w.dtype.itemsize + b.size * b.dtype.itemsize
                           for (w, b) in prepared_params)          # default double-buffered
    act_bytes = 2 * tb * in_dim * xbytes + 2 * tb * out_p * obytes  # double-buffered x / out
    hid_max = max(w.shape[1] for (w, _) in prepared_params)
    interm_bytes = 2 * tb * hid_max * 4                             # f32 accumulators (slack)
    needed = weight_bytes + act_bytes + interm_bytes
    try:
        vmem_cap = int(pltpu.get_tpu_info().vmem_capacity_bytes)    # 64 MiB v7x, 128 MiB v5e/v6e
    except Exception:
        vmem_cap = 64 * 1024 * 1024
    vmem_limit = int(min(int(0.8 * vmem_cap),
                         max(4 * 1024 * 1024, int(1.25 * needed) + (1 << 20))))

    flops = 2 * B_pad * sum(w.shape[0] * w.shape[1] for (w, _) in prepared_params)
    bytes_accessed = (B_pad * in_dim * xbytes
                      + sum(w.size * w.dtype.itemsize + b.size * b.dtype.itemsize
                            for (w, b) in prepared_params)
                      + B_pad * out_p * obytes)
    cost = pl.CostEstimate(flops=flops, transcendentals=0, bytes_accessed=bytes_accessed)

    kernel = _make_mlp_kernel(num_layers, compute_dtype)
    out_padded = pl.pallas_call(
        kernel,
        out_shape=jax.ShapeDtypeStruct((B_pad, out_p), out_dtype),
        grid_spec=pltpu.PrefetchScalarGridSpec(
            num_scalar_prefetch=0,
            grid=grid,
            in_specs=in_specs,
            out_specs=out_spec,
        ),
        compiler_params=pltpu.CompilerParams(
            dimension_semantics=("parallel",),
            vmem_limit_bytes=vmem_limit,
        ),
        cost_estimate=cost,
    )(x, *flat_args)

    return out_padded[:B, :out_dim]


def _reference_forward(x, params, compute_dtype=jnp.bfloat16):
    """Pure-JAX reference with the same bf16-matmul / f32-accumulate arithmetic."""
    h = x.astype(compute_dtype)
    for i, (w, b) in enumerate(params):
        h = jnp.dot(h, w.astype(compute_dtype), preferred_element_type=jnp.float32)
        h = h + b.astype(jnp.float32)
        if i < len(params) - 1:
            h = jnp.maximum(h, 0.0).astype(compute_dtype)
    return h.astype(x.dtype)


if __name__ == "__main__":
    # Small shapes consistent with the module's forward: x (batch, input_dim).
    batch, input_dim, hidden_dim, output_dim = 16, 32, 64, 32
    num_layers = 2

    key = jax.random.PRNGKey(0)
    k_x, k_p = jax.random.split(key)
    x = jax.random.normal(k_x, (batch, input_dim), jnp.float32)
    params = init_occupation_encoder_params(
        input_dim, hidden_dim, output_dim, num_layers=num_layers, key=k_p)

    # One-time parameter prep (padding + bf16 cast) outside the jitted forward.
    prepared = prepare_occupation_encoder_params(params)
    prepared = jax.block_until_ready(prepared)

    out = occupation_encoder_forward(x, prepared, out_dim=output_dim)
    out = jax.block_until_ready(out)

    ref = _reference_forward(x, params)
    assert out.shape == (batch, output_dim)
    assert jnp.allclose(out, ref, atol=2e-3, rtol=2e-3), "mismatch vs reference"

    print("KERNEL_OK")
</pallas_src>

<mosaic_0001>
module attributes {stable_mosaic.version = 11 : i64} {
  func.func @kernel(%arg0: i32, %arg1: memref<16x32xf32, #tpu.memory_space<vmem>>, %arg2: memref<32x128xbf16, #tpu.memory_space<vmem>>, %arg3: memref<1x128xf32, #tpu.memory_space<vmem>>, %arg4: memref<128x128xbf16, #tpu.memory_space<vmem>>, %arg5: memref<1x128xf32, #tpu.memory_space<vmem>>, %arg6: memref<16x128xf32, #tpu.memory_space<vmem>>) attributes {dimension_semantics = [#tpu.dimension_semantics<parallel>], iteration_bounds = array<i64: 1>, scalar_prefetch = 0 : i64, scratch_operands = 0 : i64, tpu.core_type = #tpu.core_type<tc>, window_params = [{transform_indices = @transform_0, window_bounds = array<i64: 16, 32>}, {pipeline_mode = #tpu.pipeline_mode<synchronous>, transform_indices = @transform_1, window_bounds = array<i64: 32, 128>}, {pipeline_mode = #tpu.pipeline_mode<synchronous>, transform_indices = @transform_2, window_bounds = array<i64: 1, 128>}, {pipeline_mode = #tpu.pipeline_mode<synchronous>, transform_indices = @transform_3, window_bounds = array<i64: 128, 128>}, {pipeline_mode = #tpu.pipeline_mode<synchronous>, transform_indices = @transform_4, window_bounds = array<i64: 1, 128>}, {transform_indices = @transform_5, window_bounds = array<i64: 16, 128>}]} {
    %c0 = arith.constant 0 : index
    %c0_0 = arith.constant 0 : index
    %0 = vector.load %arg1[%c0, %c0_0] : memref<16x32xf32, #tpu.memory_space<vmem>>, vector<16x32xf32>
    %1 = arith.truncf %0 : vector<16x32xf32> to vector<16x32xbf16>
    %c0_1 = arith.constant 0 : index
    %c0_2 = arith.constant 0 : index
    %2 = vector.load %arg2[%c0_1, %c0_2] : memref<32x128xbf16, #tpu.memory_space<vmem>>, vector<32x128xbf16>
    %c0_3 = arith.constant 0 : index
    %c0_4 = arith.constant 0 : index
    %3 = vector.load %arg3[%c0_3, %c0_4] : memref<1x128xf32, #tpu.memory_space<vmem>>, vector<1x128xf32>
    %cst = arith.constant dense<0.000000e+00> : vector<16x128xf32>
    %4 = tpu.matmul %1, %2, %cst {dimension_numbers = #tpu.dot_dimension_numbers<[1], [0], [0], [1], [0, 0, 1, 1], [], []>} : vector<16x32xbf16>, vector<32x128xbf16>, vector<16x128xf32> -> vector<16x128xf32>
    %5 = vector.broadcast %3 : vector<1x128xf32> to vector<16x128xf32>
    %6 = arith.addf %4, %5 : vector<16x128xf32>
    %cst_5 = arith.constant 0.000000e+00 : f32
    %7 = vector.broadcast %cst_5 : f32 to vector<16x128xf32>
    %8 = arith.maximumf %6, %7 : vector<16x128xf32>
    %9 = arith.truncf %8 : vector<16x128xf32> to vector<16x128xbf16>
    %c0_6 = arith.constant 0 : index
    %c0_7 = arith.constant 0 : index
    %10 = vector.load %arg4[%c0_6, %c0_7] : memref<128x128xbf16, #tpu.memory_space<vmem>>, vector<128x128xbf16>
    %c0_8 = arith.constant 0 : index
    %c0_9 = arith.constant 0 : index
    %11 = vector.load %arg5[%c0_8, %c0_9] : memref<1x128xf32, #tpu.memory_space<vmem>>, vector<1x128xf32>
    %cst_10 = arith.constant dense<0.000000e+00> : vector<16x128xf32>
    %12 = tpu.matmul %9, %10, %cst_10 {dimension_numbers = #tpu.dot_dimension_numbers<[1], [0], [0], [1], [0, 0, 1, 1], [], []>} : vector<16x128xbf16>, vector<128x128xbf16>, vector<16x128xf32> -> vector<16x128xf32>
    %13 = vector.broadcast %11 : vector<1x128xf32> to vector<16x128xf32>
    %14 = arith.addf %12, %13 : vector<16x128xf32>
    %c0_11 = arith.constant 0 : index
    %c0_12 = arith.constant 0 : index
    %15 = vector.load %arg6[%c0_11, %c0_12] : memref<16x128xf32, #tpu.memory_space<vmem>>, vector<16x128xf32>
    tpu.vector_store %arg6[%c0_11, %c0_12], %14 {strides = array<i32>} : memref<16x128xf32, #tpu.memory_space<vmem>>, vector<16x128xf32>,
    return
  }
  func.func @transform_0(%arg0: i32) -> (i32, i32) {
    %c0_i32 = arith.constant 0 : i32
    %c0_i32_0 = arith.constant 0 : i32
    return %arg0, %c0_i32 : i32, i32
  }
  func.func @transform_1(%arg0: i32) -> (i32, i32) {
    %c0_i32 = arith.constant 0 : i32
    %c0_i32_0 = arith.constant 0 : i32
    %c0_i32_1 = arith.constant 0 : i32
    return %c0_i32, %c0_i32_0 : i32, i32
  }
  func.func @transform_2(%arg0: i32) -> (i32, i32) {
    %c0_i32 = arith.constant 0 : i32
    %c0_i32_0 = arith.constant 0 : i32
    %c0_i32_1 = arith.constant 0 : i32
    return %c0_i32, %c0_i32_0 : i32, i32
  }
  func.func @transform_3(%arg0: i32) -> (i32, i32) {
    %c0_i32 = arith.constant 0 : i32
    %c0_i32_0 = arith.constant 0 : i32
    %c0_i32_1 = arith.constant 0 : i32
    return %c0_i32, %c0_i32_0 : i32, i32
  }
  func.func @transform_4(%arg0: i32) -> (i32, i32) {
    %c0_i32 = arith.constant 0 : i32
    %c0_i32_0 = arith.constant 0 : i32
    %c0_i32_1 = arith.constant 0 : i32
    return %c0_i32, %c0_i32_0 : i32, i32
  }
  func.func @transform_5(%arg0: i32) -> (i32, i32) {
    %c0_i32 = arith.constant 0 : i32
    %c0_i32_0 = arith.constant 0 : i32
    return %arg0, %c0_i32 : i32, i32
  }
}

</mosaic_0001>

<llo_original>
// kernel: occupation_encoder_forward.1
$region0: #{occupation_encoder_forward.1}
  #allocation0 [shape = 'u32[]', space=smem, size = 0x4, offset = 0x4, fixed_abs, tag = 'smem constant byte address 0x4 - core index']
  #allocation1 [shape = 'u32[144,128]{1,0:T(1,128)}', space=vmem, size = 0x12000, scoped, tag = 'internal scratch']
  %s0 = inlined_call_operand.hbm [shape: f32[16,32], index: 0, kind: input, shape index: {}]
  %s1 = inlined_call_operand.hbm [shape: bf16[32,128], index: 1, kind: input, shape index: {}]
  %s2 = inlined_call_operand.vmem [shape: f32[1,128], index: 2, kind: input, shape index: {}]
  %s3 = inlined_call_operand.hbm [shape: bf16[128,128], index: 3, kind: input, shape index: {}]
  %s4 = inlined_call_operand.vmem [shape: f32[1,128], index: 4, kind: input, shape index: {}]
  %s5 = inlined_call_operand.hbm [shape: f32[16,128], index: 5, kind: output, shape index: {}]
  %s6 = sld [smem:[#allocation0]]
  $region42: #{occupation_encoder_forward.1} parent=0
    _
  %s8 = ssub.s32 1, %s6
  %s9 = scalar_select 0, %s8, %s6
  $region1: #{occupation_encoder_forward.1} parent=0
    #allocation2 [shape = 'u8[8192]{0}', space=vmem, size = 0x2000, scoped, tag = 'input window, operand 0, single buffered']
    #allocation3 [shape = 's32[1]{0}', space=sflag, size = 0x4, scoped, tag = 'scoped memory for occupation_encoder_forward.1']
    #allocation4 [shape = 's32[1]{0}', space=sflag, size = 0x4, scoped, tag = 'scoped memory for occupation_encoder_forward.1']
    #allocation5 [shape = 'u8[8192]{0}', space=vmem, size = 0x2000, scoped, tag = 'input window, operand 1, single buffered']
    #allocation6 [shape = 's32[1]{0}', space=sflag, size = 0x4, scoped, tag = 'scoped memory for occupation_encoder_forward.1']
    #allocation7 [shape = 'u8[32768]{0}', space=vmem, size = 0x8000, scoped, tag = 'input window, operand 3, single buffered']
    #allocation8 [shape = 'u8[8192]{0}', space=vmem, size = 0x2000, scoped, tag = 'output window, operand 0, single buffered']
    %10 = vsyncpa [#allocation3], 0
    %11 = vsyncpa [#allocation6], 0
    %12 = vsyncpa [#allocation4], 0
    // Predicated region
    $region2: #{occupation_encoder_forward.1} parent=1 // pred_check
      _
    $region3: #{occupation_encoder_forward.1} parent=1 // pred_check_branch
      %14 = sbr.rel (0) target = $region5
    $region4: #{occupation_encoder_forward.1} parent=1 // pred_region
      %s16 = ssub.s32 256, 256
      %17 = vsyncadd [#allocation3], %s16
      %s18 = sshll.u32 [#allocation2], 4
      %s19 = int_to_ptr.vmem [resolvable:$true] %s18
      %24 = dma.hbm_to_vmem [thread:$0]  %s0, 256, %s19, [#allocation3], 128, 128, 8
    $region5: #{occupation_encoder_forward.1} parent=1 // pred_fallthru
      _
    // Predicated region
    $region6: #{occupation_encoder_forward.1} parent=1 // pred_check
      _
    $region7: #{occupation_encoder_forward.1} parent=1 // pred_check_branch
      %26 = sbr.rel (0) target = $region9
    $region8: #{occupation_encoder_forward.1} parent=1 // pred_region
      %s28 = ssub.s32 256, 256
      %29 = vsyncadd [#allocation6], %s28
      %s30 = sshll.u32 [#allocation5], 4
      %s31 = int_to_ptr.vmem [resolvable:$true] %s30
      %36 = dma.hbm_to_vmem [thread:$0]  %s1, 256, %s31, [#allocation6], 64, 64, 4
    $region9: #{occupation_encoder_forward.1} parent=1 // pred_fallthru
      _
    // Predicated region
    $region10: #{occupation_encoder_forward.1} parent=1 // pred_check
      _
    $region11: #{occupation_encoder_forward.1} parent=1 // pred_check_branch
      %38 = sbr.rel (0) target = $region13
    $region12: #{occupation_encoder_forward.1} parent=1 // pred_region
      _
    $region13: #{occupation_encoder_forward.1} parent=1 // pred_fallthru
      _
    // Predicated region
    $region14: #{occupation_encoder_forward.1} parent=1 // pred_check
      _
    $region15: #{occupation_encoder_forward.1} parent=1 // pred_check_branch
      %40 = sbr.rel (0) target = $region17
    $region16: #{occupation_encoder_forward.1} parent=1 // pred_region
      %s42 = ssub.s32 1024, 1024
      %43 = vsyncadd [#allocation6], %s42
      %s44 = sshll.u32 [#allocation7], 4
      %s45 = int_to_ptr.vmem [resolvable:$true] %s44
      %50 = dma.hbm_to_vmem [thread:$0]  %s3, 1024, %s45, [#allocation6], 64, 64, 4
    $region17: #{occupation_encoder_forward.1} parent=1 // pred_fallthru
      _
    // Predicated region
    $region18: #{occupation_encoder_forward.1} parent=1 // pred_check
      _
    $region19: #{occupation_encoder_forward.1} parent=1 // pred_check_branch
      %52 = sbr.rel (0) target = $region21
    $region20: #{occupation_encoder_forward.1} parent=1 // pred_region
      _
    $region21: #{occupation_encoder_forward.1} parent=1 // pred_fallthru
      _
    // Predicated region
    $region22: #{occupation_encoder_forward.1} parent=1 // pred_check
      _
    $region23: #{occupation_encoder_forward.1} parent=1 // pred_check_branch
      %54 = sbr.rel (0) target = $region25
    $region24: #{occupation_encoder_forward.1} parent=1 // pred_region
      %55 = dma.done [#allocation3], 256
    $region25: #{occupation_encoder_forward.1} parent=1 // pred_fallthru
      _
    // Predicated region
    $region26: #{occupation_encoder_forward.1} parent=1 // pred_check
      _
    $region27: #{occupation_encoder_forward.1} parent=1 // pred_check_branch
      %57 = sbr.rel (0) target = $region29
    $region28: #{occupation_encoder_forward.1} parent=1 // pred_region
      %58 = dma.done [#allocation6], 256
    $region29: #{occupation_encoder_forward.1} parent=1 // pred_fallthru
      _
    // Predicated region
    $region30: #{occupation_encoder_forward.1} parent=1 // pred_check
      _
    $region31: #{occupation_encoder_forward.1} parent=1 // pred_check_branch
      %60 = sbr.rel (0) target = $region33
    $region32: #{occupation_encoder_forward.1} parent=1 // pred_region
      %61 = dma.done [#allocation6], 1024
    $region33: #{occupation_encoder_forward.1} parent=1 // pred_fallthru
      _
    %v63 = vld [vmem:[#allocation2] sm:$0xff]
    %v64 = vld [vmem:[#allocation2 + $0x8] sm:$0xff]
    %v65 = vpack.c.bf16 %v64, %v63
    %v66 = vld [vmem:[#allocation5] sm:$0xf]
    %v67 = vld [vmem:[#allocation5 + $0x4] sm:$0xf]
    %v68 = vld [vmem:[#allocation5 + $0x8] sm:$0xf]
    %v69 = vld [vmem:[#allocation5 + $0xc] sm:$0xf]
    %v70 = vld [vmem:[%s2] sm:$0x1]
    %v72 = vlaneseq
    %v73 = vshrl.u32 %v72, 7
    %v74 = vsub.s32 0, %v73
    %v75 = vrot.slane %v70, %v74
    %v81 = vunpack.c.l.b16 %v66
    %v82 = vunpack.c.l.b16 %v67
    %v83 = vunpack.c.l.b16 %v68
    %v84 = vunpack.c.l.b16 %v69
    %v85 = vpack.c.b16 %v82, %v81
    %v86 = vpack.c.b16 %v84, %v83
    %vm89 = vcmask 261120
    %v91 = vsel %vm89, %v65, 0
    %93 = vmatprep.subr.bf16.mxu0 0
    %94 = vmatpush1.bf16.msra.mxu0 %v85
    %95 = vmatprep.subr.bf16.mxu0 0
    %96 = vmatpush1.bf16.msra.mxu0 %v86
    %97 = vmatprep.subr.bf16.mxu0 0
    %98 = vmatpush1.bf16.msra.mxu0 0
    %99 = vmatprep.subr.bf16.mxu0 0
    %100 = vmatpush1.bf16.msra.mxu0 0
    %101 = vmatprep.subr.bf16.mxu0 0
    %102 = vmatpush1.bf16.msra.mxu0 0
    %103 = vmatprep.subr.bf16.mxu0 0
    %104 = vmatpush1.bf16.msra.mxu0 0
    %105 = vmatprep.subr.bf16.mxu0 0
    %106 = vmatpush1.bf16.msra.mxu0 0
    %107 = vmatprep.subr.bf16.mxu0 0
    %108 = vmatpush1.bf16.msra.mxu0 0
    %109 = vmatprep.subr.bf16.mxu0 0
    %110 = vmatpush1.bf16.msra.mxu0 0
    %111 = vmatprep.subr.bf16.mxu0 0
    %112 = vmatpush1.bf16.msra.mxu0 0
    %113 = vmatprep.subr.bf16.mxu0 0
    %114 = vmatpush1.bf16.msra.mxu0 0
    %115 = vmatprep.subr.bf16.mxu0 0
    %116 = vmatpush1.bf16.msra.mxu0 0
    %117 = vmatprep.subr.bf16.mxu0 0
    %118 = vmatpush1.bf16.msra.mxu0 0
    %119 = vmatprep.subr.bf16.mxu0 0
    %120 = vmatpush1.bf16.msra.mxu0 0
    %121 = vmatprep.subr.bf16.mxu0 0
    %122 = vmatpush1.bf16.msra.mxu0 0
    %123 = vmatprep.subr.bf16.mxu0 0
    %124 = vmatpush1.bf16.msra.mxu0 0
    %125 = vmatprep.mubr.bf16.mxu0 0
    %126 = vmatmul.mubr.bf16.gmra.mrb[0].mxu0 %v91
    %v127 = vpop.f32.mrb[0].mxu0
    %v128 = vadd.f32 %v75, %v127
    %v129 = vpop.f32.mrb[0].mxu0
    %v130 = vpop.f32.mrb[0].mxu0
    %v131 = vadd.f32 %v75, %v130
    %v132 = vpop.f32.mrb[0].mxu0
    %133 = vdwg.mxu0
    %v134 = vmax.f32 %v128, 0.0
    %v135 = vmax.f32 %v131, 0.0
    %v136 = vpack.c.bf16 %v135, %v134
    %v137 = vld [vmem:[#allocation7] sm:$0xf]
    %v138 = vld [vmem:[#allocation7 + $0x4] sm:$0xf]
    %v139 = vld [vmem:[#allocation7 + $0x8] sm:$0xf]
    %v140 = vld [vmem:[#allocation7 + $0xc] sm:$0xf]
    %v141 = vld [vmem:[#allocation7 + $0x10] sm:$0xf]
    %v142 = vld [vmem:[#allocation7 + $0x14] sm:$0xf]
    %v143 = vld [vmem:[#allocation7 + $0x18] sm:$0xf]
    %v144 = vld [vmem:[#allocation7 + $0x1c] sm:$0xf]
    %v145 = vld [vmem:[#allocation7 + $0x20] sm:$0xf]
    %v146 = vld [vmem:[#allocation7 + $0x24] sm:$0xf]
    %v147 = vld [vmem:[#allocation7 + $0x28] sm:$0xf]
    %v148 = vld [vmem:[#allocation7 + $0x2c] sm:$0xf]
    %v149 = vld [vmem:[#allocation7 + $0x30] sm:$0xf]
    %v150 = vld [vmem:[#allocation7 + $0x34] sm:$0xf]
    %v151 = vld [vmem:[#allocation7 + $0x38] sm:$0xf]
    %v152 = vld [vmem:[#allocation7 + $0x3c] sm:$0xf]
    %v153 = vld [vmem:[%s4] sm:$0x1]
    %v155 = vlaneseq
    %v156 = vshrl.u32 %v155, 7
    %v157 = vsub.s32 0, %v156
    %v158 = vrot.slane %v153, %v157
    %v176 = vunpack.c.l.b16 %v137
    %v177 = vunpack.c.l.b16 %v138
    %v178 = vunpack.c.l.b16 %v139
    %v179 = vunpack.c.l.b16 %v140
    %v180 = vunpack.c.l.b16 %v141
    %v181 = vunpack.c.l.b16 %v142
    %v182 = vunpack.c.l.b16 %v143
    %v183 = vunpack.c.l.b16 %v144
    %v184 = vunpack.c.l.b16 %v145
    %v185 = vunpack.c.l.b16 %v146
    %v186 = vunpack.c.l.b16 %v147
    %v187 = vunpack.c.l.b16 %v148
    %v188 = vunpack.c.l.b16 %v149
    %v189 = vunpack.c.l.b16 %v150
    %v190 = vunpack.c.l.b16 %v151
    %v191 = vunpack.c.l.b16 %v152
    %v192 = vpack.c.b16 %v177, %v176
    %v193 = vpack.c.b16 %v179, %v178
    %v194 = vpack.c.b16 %v181, %v180
    %v195 = vpack.c.b16 %v183, %v182
    %v196 = vpack.c.b16 %v185, %v184
    %v197 = vpack.c.b16 %v187, %v186
    %v198 = vpack.c.b16 %v189, %v188
    %v199 = vpack.c.b16 %v191, %v190
    %208 = vmatprep.subr.bf16.mxu0 0
    %209 = vmatpush1.bf16.msra.mxu0 %v192
    %210 = vmatprep.subr.bf16.mxu0 0
    %211 = vmatpush1.bf16.msra.mxu0 %v193
    %212 = vmatprep.subr.bf16.mxu0 0
    %213 = vmatpush1.bf16.msra.mxu0 %v194
    %214 = vmatprep.subr.bf16.mxu0 0
    %215 = vmatpush1.bf16.msra.mxu0 %v195
    %216 = vmatprep.subr.bf16.mxu0 0
    %217 = vmatpush1.bf16.msra.mxu0 %v196
    %218 = vmatprep.subr.bf16.mxu0 0
    %219 = vmatpush1.bf16.msra.mxu0 %v197
    %220 = vmatprep.subr.bf16.mxu0 0
    %221 = vmatpush1.bf16.msra.mxu0 %v198
    %222 = vmatprep.subr.bf16.mxu0 0
    %223 = vmatpush1.bf16.msra.mxu0 %v199
    %224 = vmatprep.subr.bf16.mxu0 0
    %225 = vmatpush1.bf16.msra.mxu0 0
    %226 = vmatprep.subr.bf16.mxu0 0
    %227 = vmatpush1.bf16.msra.mxu0 0
    %228 = vmatprep.subr.bf16.mxu0 0
    %229 = vmatpush1.bf16.msra.mxu0 0
    %230 = vmatprep.subr.bf16.mxu0 0
    %231 = vmatpush1.bf16.msra.mxu0 0
    %232 = vmatprep.subr.bf16.mxu0 0
    %233 = vmatpush1.bf16.msra.mxu0 0
    %234 = vmatprep.subr.bf16.mxu0 0
    %235 = vmatpush1.bf16.msra.mxu0 0
    %236 = vmatprep.subr.bf16.mxu0 0
    %237 = vmatpush1.bf16.msra.mxu0 0
    %238 = vmatprep.subr.bf16.mxu0 0
    %239 = vmatpush1.bf16.msra.mxu0 0
    %240 = vmatprep.mubr.bf16.mxu0 0
    %241 = vmatmul.mubr.bf16.gmra.mrb[0].mxu0 %v136
    %v242 = vpop.f32.mrb[0].mxu0
    %v243 = vadd.f32 %v158, %v242
    %v244 = vpop.f32.mrb[0].mxu0
    %v245 = vpop.f32.mrb[0].mxu0
    %v246 = vadd.f32 %v158, %v245
    %v247 = vpop.f32.mrb[0].mxu0
    %248 = vdwg.mxu0
    %249 = vst [vmem:[#allocation8] sm:$0xff] %v243
    %250 = vst [vmem:[#allocation8 + $0x8] sm:$0xff] %v246
    // Predicated region
    $region34: #{occupation_encoder_forward.1} parent=1 // pred_check
      _
    $region35: #{occupation_encoder_forward.1} parent=1 // pred_check_branch
      %252 = sbr.rel (0) target = $region37
    $region36: #{occupation_encoder_forward.1} parent=1 // pred_region
      %s254 = ssub.s32 256, 256
      %255 = vsyncadd [#allocation4], %s254
      %s256 = sshll.u32 [#allocation8], 4
      %s257 = int_to_ptr.vmem [resolvable:$true] %s256
      %262 = dma.vmem_to_hbm [thread:$0]  %s257, 256, %s5, [#allocation4], 128, 128, 8
    $region37: #{occupation_encoder_forward.1} parent=1 // pred_fallthru
      _
    // Predicated region
    $region38: #{occupation_encoder_forward.1} parent=1 // pred_check
      _
    $region39: #{occupation_encoder_forward.1} parent=1 // pred_check_branch
      %264 = sbr.rel (0) target = $region41
    $region40: #{occupation_encoder_forward.1} parent=1 // pred_region
      %265 = dma.done [#allocation4], 256
    $region41: #{occupation_encoder_forward.1} parent=1 // pred_fallthru
      _
    %266 = vsyncpa [#allocation3], 1
    %267 = vsyncpa [#allocation6], 1
    %268 = vsyncpa [#allocation4], 1

</llo_original>
